<compile_context>
chip_gen: v7x
topology: tpu7x:2x2x1
jax: 0.10.0
libtpu: 0.0.40
codegen_flags: <defaults>
</compile_context>

<pallas_src>
import jax
import jax.numpy as jnp
from jax.experimental import pallas as pl
from jax.experimental.pallas import tpu as pltpu

NCORES = 2  # v7x has 2 TCs/chip; on v5e/v6e this is just one extra (cheap) grid step.


def _cdiv(a, b):
    return -(-a // b)


def _round_up(a, b):
    return _cdiv(a, b) * b


def _vmem_capacity_bytes():
    try:
        return int(pltpu.get_tpu_info().vmem_capacity_bytes)
    except Exception:
        return 64 * 1024 * 1024  # conservative default (v7x per-TC VMEM)


def _l1_partial_sums_kernel(src_ref, tgt_ref, acc_ref):
    """Accumulate per-lane [sum, sum_sq] for src and tgt over row tiles."""
    i = pl.program_id(1)

    @pl.when(i == 0)
    def _():
        acc_ref[...] = jnp.zeros_like(acc_ref)

    s = src_ref[...].astype(jnp.float32)  # (tm, W)
    t = tgt_ref[...].astype(jnp.float32)
    tm, w = s.shape
    s3 = s.reshape(tm // 8, 8, w)
    t3 = t.reshape(tm // 8, 8, w)

    # Steady state is pure VPU (vreg-to-vreg adds); the cross-sublane and
    # cross-core reduces are deferred to the tiny finalize outside the kernel.
    acc_ref[0, 0] += jnp.sum(s3, axis=0)
    acc_ref[0, 1] += jnp.sum(s3 * s3, axis=0)
    acc_ref[0, 2] += jnp.sum(t3, axis=0)
    acc_ref[0, 3] += jnp.sum(t3 * t3, axis=0)


def l1_loss(source_features, target_features,
            loss_weight_mean=1.0, loss_weight_var=1.0):
    """Pallas implementation of L1Loss.forward.

    source_features / target_features: (B, N, D) arrays.
    Returns {'loss_mean_diff': scalar, 'loss_var_diff': scalar}.
    """
    assert source_features.shape == target_features.shape
    B, N, D = source_features.shape
    M = B * N
    dtype = source_features.dtype
    itemsize = jnp.dtype(dtype).itemsize

    src = source_features.reshape(M, D)
    tgt = target_features.reshape(M, D)

    # ---- Lane-dense folding: pack r rows into the 128-lane axis if D is small.
    r = 128 // D if (D < 128 and 128 % D == 0) else 1
    W = r * D
    M_fold = _cdiv(M, r)

    # ---- Tile selection (generation-aware via VMEM capacity).
    vmem_cap = _vmem_capacity_bytes()
    vmem_limit = int(min(vmem_cap * 3 // 4, 96 * 1024 * 1024))  # ~48 MiB v7x, 96 MiB v5e/v6e
    tile_budget = vmem_limit // 2            # 2 inputs x 2 pipeline buffers; rest = headroom
    sublane = 8 if itemsize >= 4 else (16 if itemsize == 2 else 32)
    bytes_per_row = W * itemsize
    tm_vmem_max = max(sublane, tile_budget // (4 * bytes_per_row))
    tm_target = max(sublane, (4 * 1024 * 1024) // bytes_per_row)  # ~4 MiB per input block
    tm = min(tm_vmem_max, tm_target)
    tm = max(sublane, (tm // sublane) * sublane)
    rows_per_core = _round_up(_cdiv(M_fold, NCORES), sublane)
    tm = min(tm, rows_per_core)              # don't allocate/pad more than needed

    steps = _cdiv(M_fold, NCORES * tm)
    M_pad_fold = NCORES * tm * steps
    M_pad_rows = M_pad_fold * r

    if M_pad_rows > M:
        src = jnp.pad(src, ((0, M_pad_rows - M), (0, 0)))
        tgt = jnp.pad(tgt, ((0, M_pad_rows - M), (0, 0)))
    src = src.reshape(M_pad_fold, W)
    tgt = tgt.reshape(M_pad_fold, W)

    in_spec = pl.BlockSpec((tm, W), lambda c, i: (c * steps + i, 0))
    out_spec = pl.BlockSpec((1, 4, 8, W), lambda c, i: (c, 0, 0, 0))

    bytes_accessed = 2 * M_pad_fold * W * itemsize + NCORES * 4 * 8 * W * 4
    flops = 3 * 2 * M_pad_fold * W  # square + two accumulating adds per element
    cost = pl.CostEstimate(flops=int(flops), transcendentals=0,
                           bytes_accessed=int(bytes_accessed))

    partials = pl.pallas_call(
        _l1_partial_sums_kernel,
        out_shape=jax.ShapeDtypeStruct((NCORES, 4, 8, W), jnp.float32),
        grid_spec=pltpu.PrefetchScalarGridSpec(
            num_scalar_prefetch=0,
            grid=(NCORES, steps),
            in_specs=[in_spec, in_spec],
            out_specs=out_spec,
        ),
        compiler_params=pltpu.CompilerParams(
            dimension_semantics=("parallel", "arbitrary"),
            vmem_limit_bytes=vmem_limit,
        ),
        cost_estimate=cost,
    )(src, tgt)

    # ---- Tiny O(D) finalize in JAX: combines the per-core / per-sublane
    # partial sums (the cross-core reduce) and unfolds the lane packing.
    sums = partials.sum(axis=(0, 2))            # (4, W)
    sums = sums.reshape(4, r, D).sum(axis=1)    # (4, D)
    inv_m = jnp.float32(1.0 / M)                # divide by ORIGINAL row count
    s_mean = sums[0] * inv_m
    s_var = sums[1] * inv_m - s_mean * s_mean   # biased (unbiased=False)
    t_mean = sums[2] * inv_m
    t_var = sums[3] * inv_m - t_mean * t_mean
    # TODO(synk): E[x^2]-E[x]^2 in f32 loses precision if |mean| >> spread over huge M.

    mean_diff = jnp.abs(s_mean - t_mean).mean() * jnp.float32(loss_weight_mean)
    var_diff = jnp.abs(s_var - t_var).mean() * jnp.float32(loss_weight_var)
    return {"loss_mean_diff": mean_diff, "loss_var_diff": var_diff}


def _reference(source_features, target_features, w_mean=1.0, w_var=1.0):
    s_mean = source_features.mean(axis=(0, 1))
    s_var = source_features.var(axis=(0, 1))   # biased, matches unbiased=False
    t_mean = target_features.mean(axis=(0, 1))
    t_var = target_features.var(axis=(0, 1))
    return {
        "loss_mean_diff": jnp.abs(s_mean - t_mean).mean() * w_mean,
        "loss_var_diff": jnp.abs(s_var - t_var).mean() * w_var,
    }


if __name__ == "__main__":
    key = jax.random.PRNGKey(0)
    k1, k2, k3, k4 = jax.random.split(key, 4)

    # Small shape consistent with the module: batch=2, tokens=8, hidden=32.
    B, N, D = 2, 8, 32
    source = jax.random.normal(k1, (B, N, D), dtype=jnp.float32)
    target = 0.5 * jax.random.normal(k2, (B, N, D), dtype=jnp.float32) + 0.1

    out = l1_loss(source, target, loss_weight_mean=1.0, loss_weight_var=1.0)
    out = jax.block_until_ready(out)
    ref = _reference(source, target)
    assert jnp.allclose(out["loss_mean_diff"], ref["loss_mean_diff"], atol=1e-5, rtol=1e-5)
    assert jnp.allclose(out["loss_var_diff"], ref["loss_var_diff"], atol=1e-5, rtol=1e-5)

    # Awkward shape: exercises zero-padding of M and lane folding with r=2.
    B2, N2, D2 = 3, 5, 64
    source2 = jax.random.normal(k3, (B2, N2, D2), dtype=jnp.float32) * 1.3 + 0.7
    target2 = jax.random.normal(k4, (B2, N2, D2), dtype=jnp.float32) * 0.8 - 0.2
    out2 = l1_loss(source2, target2, loss_weight_mean=0.5, loss_weight_var=2.0)
    out2 = jax.block_until_ready(out2)
    ref2 = _reference(source2, target2, 0.5, 2.0)
    assert jnp.allclose(out2["loss_mean_diff"], ref2["loss_mean_diff"], atol=1e-5, rtol=1e-5)
    assert jnp.allclose(out2["loss_var_diff"], ref2["loss_var_diff"], atol=1e-5, rtol=1e-5)

    print("KERNEL_OK")
</pallas_src>

<mosaic_0001>
module attributes {stable_mosaic.version = 11 : i64} {
  func.func @_l1_partial_sums_kernel(%arg0: i32, %arg1: i32, %arg2: memref<8x128xf32, #tpu.memory_space<vmem>>, %arg3: memref<8x128xf32, #tpu.memory_space<vmem>>, %arg4: memref<1x4x8x128xf32, #tpu.memory_space<vmem>>) attributes {dimension_semantics = [#tpu.dimension_semantics<parallel>, #tpu.dimension_semantics<arbitrary>], iteration_bounds = array<i64: 2, 1>, scalar_prefetch = 0 : i64, scratch_operands = 0 : i64, tpu.core_type = #tpu.core_type<tc>, window_params = [{transform_indices = @transform_0, window_bounds = array<i64: 8, 128>}, {transform_indices = @transform_1, window_bounds = array<i64: 8, 128>}, {transform_indices = @transform_2, window_bounds = array<i64: 1, 4, 8, 128>}]} {
    %c0_i32 = arith.constant 0 : i32
    %0 = arith.cmpi eq, %arg1, %c0_i32 : i32
    %1 = arith.extui %0 : i1 to i32
    %c0_i32_0 = arith.constant 0 : i32
    %2 = arith.cmpi ne, %1, %c0_i32_0 : i32
    scf.if %2 {
      %cst_36 = arith.constant 0.000000e+00 : f32
      %37 = vector.broadcast %cst_36 : f32 to vector<1x4x8x128xf32>
      %c0_37 = arith.constant 0 : index
      %c0_38 = arith.constant 0 : index
      %c0_39 = arith.constant 0 : index
      %c0_40 = arith.constant 0 : index
      %38 = vector.load %arg4[%c0_37, %c0_38, %c0_39, %c0_40] : memref<1x4x8x128xf32, #tpu.memory_space<vmem>>, vector<1x4x8x128xf32>
      tpu.vector_store %arg4[%c0_37, %c0_38, %c0_39, %c0_40], %37 {strides = array<i32>} : memref<1x4x8x128xf32, #tpu.memory_space<vmem>>, vector<1x4x8x128xf32>,
    } else {
    }
    %c0 = arith.constant 0 : index
    %c0_1 = arith.constant 0 : index
    %3 = vector.load %arg2[%c0, %c0_1] : memref<8x128xf32, #tpu.memory_space<vmem>>, vector<8x128xf32>
    %c0_2 = arith.constant 0 : index
    %c0_3 = arith.constant 0 : index
    %4 = vector.load %arg3[%c0_2, %c0_3] : memref<8x128xf32, #tpu.memory_space<vmem>>, vector<8x128xf32>
    %5 = vector.shape_cast %3 : vector<8x128xf32> to vector<1x8x128xf32>
    %6 = vector.shape_cast %4 : vector<8x128xf32> to vector<1x8x128xf32>
    %c0_4 = arith.constant 0 : index
    %c0_5 = arith.constant 0 : index
    %c0_6 = arith.constant 0 : index
    %c0_7 = arith.constant 0 : index
    %7 = vector.load %arg4[%c0_4, %c0_5, %c0_6, %c0_7] : memref<1x4x8x128xf32, #tpu.memory_space<vmem>>, vector<1x1x8x128xf32>
    %8 = vector.shape_cast %7 : vector<1x1x8x128xf32> to vector<8x128xf32>
    %cst = arith.constant dense<0.000000e+00> : vector<8x128xf32>
    %9 = vector.multi_reduction <add>, %5, %cst [0] : vector<1x8x128xf32> to vector<8x128xf32>
    %10 = arith.addf %8, %9 : vector<8x128xf32>
    %c0_8 = arith.constant 0 : index
    %c0_9 = arith.constant 0 : index
    %c0_10 = arith.constant 0 : index
    %c0_11 = arith.constant 0 : index
    %11 = vector.load %arg4[%c0_8, %c0_9, %c0_10, %c0_11] : memref<1x4x8x128xf32, #tpu.memory_space<vmem>>, vector<1x1x8x128xf32>
    %12 = vector.shape_cast %11 : vector<1x1x8x128xf32> to vector<8x128xf32>
    %13 = vector.shape_cast %10 : vector<8x128xf32> to vector<1x1x8x128xf32>
    tpu.vector_store %arg4[%c0_8, %c0_9, %c0_10, %c0_11], %13 {strides = array<i32>} : memref<1x4x8x128xf32, #tpu.memory_space<vmem>>, vector<1x1x8x128xf32>,
    %c0_12 = arith.constant 0 : index
    %c1 = arith.constant 1 : index
    %c0_13 = arith.constant 0 : index
    %c0_14 = arith.constant 0 : index
    %14 = vector.load %arg4[%c0_12, %c1, %c0_13, %c0_14] : memref<1x4x8x128xf32, #tpu.memory_space<vmem>>, vector<1x1x8x128xf32>
    %15 = vector.shape_cast %14 : vector<1x1x8x128xf32> to vector<8x128xf32>
    %16 = arith.mulf %5, %5 : vector<1x8x128xf32>
    %cst_15 = arith.constant dense<0.000000e+00> : vector<8x128xf32>
    %17 = vector.multi_reduction <add>, %16, %cst_15 [0] : vector<1x8x128xf32> to vector<8x128xf32>
    %18 = arith.addf %15, %17 : vector<8x128xf32>
    %c0_16 = arith.constant 0 : index
    %c1_17 = arith.constant 1 : index
    %c0_18 = arith.constant 0 : index
    %c0_19 = arith.constant 0 : index
    %19 = vector.load %arg4[%c0_16, %c1_17, %c0_18, %c0_19] : memref<1x4x8x128xf32, #tpu.memory_space<vmem>>, vector<1x1x8x128xf32>
    %20 = vector.shape_cast %19 : vector<1x1x8x128xf32> to vector<8x128xf32>
    %21 = vector.shape_cast %18 : vector<8x128xf32> to vector<1x1x8x128xf32>
    tpu.vector_store %arg4[%c0_16, %c1_17, %c0_18, %c0_19], %21 {strides = array<i32>} : memref<1x4x8x128xf32, #tpu.memory_space<vmem>>, vector<1x1x8x128xf32>,
    %c0_20 = arith.constant 0 : index
    %c2 = arith.constant 2 : index
    %c0_21 = arith.constant 0 : index
    %c0_22 = arith.constant 0 : index
    %22 = vector.load %arg4[%c0_20, %c2, %c0_21, %c0_22] : memref<1x4x8x128xf32, #tpu.memory_space<vmem>>, vector<1x1x8x128xf32>
    %23 = vector.shape_cast %22 : vector<1x1x8x128xf32> to vector<8x128xf32>
    %cst_23 = arith.constant dense<0.000000e+00> : vector<8x128xf32>
    %24 = vector.multi_reduction <add>, %6, %cst_23 [0] : vector<1x8x128xf32> to vector<8x128xf32>
    %25 = arith.addf %23, %24 : vector<8x128xf32>
    %c0_24 = arith.constant 0 : index
    %c2_25 = arith.constant 2 : index
    %c0_26 = arith.constant 0 : index
    %c0_27 = arith.constant 0 : index
    %26 = vector.load %arg4[%c0_24, %c2_25, %c0_26, %c0_27] : memref<1x4x8x128xf32, #tpu.memory_space<vmem>>, vector<1x1x8x128xf32>
    %27 = vector.shape_cast %26 : vector<1x1x8x128xf32> to vector<8x128xf32>
    %28 = vector.shape_cast %25 : vector<8x128xf32> to vector<1x1x8x128xf32>
    tpu.vector_store %arg4[%c0_24, %c2_25, %c0_26, %c0_27], %28 {strides = array<i32>} : memref<1x4x8x128xf32, #tpu.memory_space<vmem>>, vector<1x1x8x128xf32>,
    %c0_28 = arith.constant 0 : index
    %c3 = arith.constant 3 : index
    %c0_29 = arith.constant 0 : index
    %c0_30 = arith.constant 0 : index
    %29 = vector.load %arg4[%c0_28, %c3, %c0_29, %c0_30] : memref<1x4x8x128xf32, #tpu.memory_space<vmem>>, vector<1x1x8x128xf32>
    %30 = vector.shape_cast %29 : vector<1x1x8x128xf32> to vector<8x128xf32>
    %31 = arith.mulf %6, %6 : vector<1x8x128xf32>
    %cst_31 = arith.constant dense<0.000000e+00> : vector<8x128xf32>
    %32 = vector.multi_reduction <add>, %31, %cst_31 [0] : vector<1x8x128xf32> to vector<8x128xf32>
    %33 = arith.addf %30, %32 : vector<8x128xf32>
    %c0_32 = arith.constant 0 : index
    %c3_33 = arith.constant 3 : index
    %c0_34 = arith.constant 0 : index
    %c0_35 = arith.constant 0 : index
    %34 = vector.load %arg4[%c0_32, %c3_33, %c0_34, %c0_35] : memref<1x4x8x128xf32, #tpu.memory_space<vmem>>, vector<1x1x8x128xf32>
    %35 = vector.shape_cast %34 : vector<1x1x8x128xf32> to vector<8x128xf32>
    %36 = vector.shape_cast %33 : vector<8x128xf32> to vector<1x1x8x128xf32>
    tpu.vector_store %arg4[%c0_32, %c3_33, %c0_34, %c0_35], %36 {strides = array<i32>} : memref<1x4x8x128xf32, #tpu.memory_space<vmem>>, vector<1x1x8x128xf32>,
    return
  }
  func.func @transform_0(%arg0: i32, %arg1: i32) -> (i32, i32) {
    %c1_i32 = arith.constant 1 : i32
    %0 = arith.muli %arg0, %c1_i32 : i32
    %1 = arith.addi %0, %arg1 : i32
    %c0_i32 = arith.constant 0 : i32
    %c0_i32_0 = arith.constant 0 : i32
    return %1, %c0_i32 : i32, i32
  }
  func.func @transform_1(%arg0: i32, %arg1: i32) -> (i32, i32) {
    %c1_i32 = arith.constant 1 : i32
    %0 = arith.muli %arg0, %c1_i32 : i32
    %1 = arith.addi %0, %arg1 : i32
    %c0_i32 = arith.constant 0 : i32
    %c0_i32_0 = arith.constant 0 : i32
    return %1, %c0_i32 : i32, i32
  }
  func.func @transform_2(%arg0: i32, %arg1: i32) -> (i32, i32, i32, i32) {
    %c0_i32 = arith.constant 0 : i32
    %c0_i32_0 = arith.constant 0 : i32
    %c0_i32_1 = arith.constant 0 : i32
    %c0_i32_2 = arith.constant 0 : i32
    return %arg0, %c0_i32, %c0_i32_0, %c0_i32_1 : i32, i32, i32, i32
  }
}

</mosaic_0001>

<llo_original>
// kernel: tpu_custom_call.1
$region0: #{tpu_custom_call.1}
  #allocation0 [shape = 'u32[]', space=smem, size = 0x4, offset = 0x4, fixed_abs, tag = 'smem constant byte address 0x4 - core index']
  #allocation1 [shape = 'u32[144,128]{1,0:T(1,128)}', space=vmem, size = 0x12000, scoped, tag = 'internal scratch']
  %s0 = inlined_call_operand.hbm [shape: f32[16,128], index: 0, kind: input, shape index: {}]
  %s1 = inlined_call_operand.hbm [shape: f32[16,128], index: 1, kind: input, shape index: {}]
  %s2 = inlined_call_operand.hbm [shape: f32[2,4,8,128], index: 2, kind: output, shape index: {}]
  %s3 = sld [smem:[#allocation0]]
  $region53: #{tpu_custom_call.1} parent=0
    _
  %s5 = ssub.s32 1, %s3
  %s6 = scalar_select 0, %s5, %s3
  $region1: #{tpu_custom_call.1} parent=0
    #allocation2 [shape = 'u8[8192]{0}', space=vmem, size = 0x2000, scoped, tag = 'input window, operand 0']
    #allocation3 [shape = 's32[2]{0}', space=sflag, size = 0x8, scoped, tag = 'scoped memory for tpu_custom_call.1']
    #allocation4 [shape = 's32[2]{0}', space=sflag, size = 0x8, scoped, tag = 'scoped memory for tpu_custom_call.1']
    #allocation5 [shape = 'u8[8192]{0}', space=vmem, size = 0x2000, scoped, tag = 'input window, operand 1']
    #allocation6 [shape = 's32[2]{0}', space=sflag, size = 0x8, scoped, tag = 'scoped memory for tpu_custom_call.1']
    #allocation7 [shape = 'u8[32768]{0}', space=vmem, size = 0x8000, scoped, tag = 'output window, operand 0']
    %7 = vsyncpa [#allocation3], 0
    %s8 = scalar_lea.sflag [#allocation3], 1
    %9 = vsyncpa %s8, 0
    %10 = vsyncpa [#allocation6], 0
    %s11 = scalar_lea.sflag [#allocation6], 1
    %12 = vsyncpa %s11, 0
    %13 = vsyncpa [#allocation4], 0
    %s14 = scalar_lea.sflag [#allocation4], 1
    %15 = vsyncpa %s14, 0
    loop: start=0, step=1, limit=4
    $region2: #{tpu_custom_call.1} parent=1 // loop_pre_header
      _
    $region3: #{tpu_custom_call.1} parent=1 // loop_header
      %s17 = sphi 0, %s21
      %p18 = scmp.ge.s32.totalorder %s17, 4
      %s24 = sphi 0, %s36
      %s25 = sphi 0, %s32
      %s26 = sphi 0, %s24
      %s27 = sphi 0, %s25
      %s28 = sphi 0, %s26
      %s29 = sphi 0, %s27
      %s41 = sphi 0, %s43
      %s44 = sphi 0, %s41
      %s45 = sphi 0, %s44
      %s61 = sphi 0, %s45
      %s69 = sphi 0, %s71
      %s72 = sphi 0, %s69
      %s73 = sphi 0, %s72
      %s89 = sphi 0, %s73
      %s95 = sphi 0, %s97
      %s98 = sphi 0, %s95
      %s99 = sphi 0, %s98
      %s115 = sphi 0, %s99
    $region4: #{tpu_custom_call.1} parent=1 // loop_header_branch
      %20 = sbr.rel (%p18) target = $region8
    $region5: #{tpu_custom_call.1} parent=1 // loop_body
      %s22 = ssub.s32 %s17, 1
      %s23 = ssub.s32 %s17, 2
      %s30 = sadd.s32 1, %s25
      %p31 = scmp.ge.s32.totalorder %s30, 1
      %s32 = scalar_select %p31, 0, %s30
      %s33 = sadd.s32 1, %s24
      %s34 = scalar_select %p31, %s33, %s24
      %p35 = scmp.ge.s32.totalorder %s34, 2
      %s36 = scalar_select %p35, 0, %s34
      %s37 = sadd.s32 %s24, %s25
      %s38 = sadd.s32 %s36, %s32
      %s39 = ssub.s32 %s37, %s38
      %p40 = scmp.eq.s32.totalorder %s39, 0
      %s42 = sadd.s32 %s41, 1
      %s43 = scalar_select %p40, %s41, %s42
      %p46 = pneg %p40
      %p47 = scmp.eq.s32.totalorder %s17, 1
      %p48 = por %p46, %p47
      %p49 = scmp.ne.s32.totalorder %s41, %s44
      %p50 = scmp.eq.s32.totalorder %s17, 0
      %p51 = por %p49, %p50
      %p52 = scmp.ne.s32.totalorder %s41, %s44
      %p53 = scmp.eq.s32.totalorder %s22, 1
      %p54 = por %p52, %p53
      %p55 = scmp.ne.s32.totalorder %s44, %s45
      %p56 = scmp.eq.s32.totalorder %s22, 0
      %p57 = por %p55, %p56
      %p58 = scmp.ne.s32.totalorder %s44, %s45
      %p59 = scmp.eq.s32.totalorder %s23, 1
      %p60 = por %p58, %p59
      %p62 = scmp.ne.s32.totalorder %s45, %s61
      %p63 = scmp.eq.s32.totalorder %s23, 0
      %p64 = por %p62, %p63
      %s65 = sadd.s32 %s24, %s25
      %s66 = sadd.s32 %s36, %s32
      %s67 = ssub.s32 %s65, %s66
      %p68 = scmp.eq.s32.totalorder %s67, 0
      %s70 = sadd.s32 %s69, 1
      %s71 = scalar_select %p68, %s69, %s70
      %p74 = pneg %p68
      %p75 = scmp.eq.s32.totalorder %s17, 1
      %p76 = por %p74, %p75
      %p77 = scmp.ne.s32.totalorder %s69, %s72
      %p78 = scmp.eq.s32.totalorder %s17, 0
      %p79 = por %p77, %p78
      %p80 = scmp.ne.s32.totalorder %s69, %s72
      %p81 = scmp.eq.s32.totalorder %s22, 1
      %p82 = por %p80, %p81
      %p83 = scmp.ne.s32.totalorder %s72, %s73
      %p84 = scmp.eq.s32.totalorder %s22, 0
      %p85 = por %p83, %p84
      %p86 = scmp.ne.s32.totalorder %s72, %s73
      %p87 = scmp.eq.s32.totalorder %s23, 1
      %p88 = por %p86, %p87
      %p90 = scmp.ne.s32.totalorder %s73, %s89
      %p91 = scmp.eq.s32.totalorder %s23, 0
      %p92 = por %p90, %p91
      %s93 = ssub.s32 %s24, %s36
      %p94 = scmp.eq.s32.totalorder %s93, 0
      %s96 = sadd.s32 %s95, 1
      %s97 = scalar_select %p94, %s95, %s96
      %p100 = pneg %p94
      %p101 = scmp.eq.s32.totalorder %s17, 1
      %p102 = por %p100, %p101
      %p103 = scmp.ne.s32.totalorder %s95, %s98
      %p104 = scmp.eq.s32.totalorder %s17, 0
      %p105 = por %p103, %p104
      %p106 = scmp.ne.s32.totalorder %s95, %s98
      %p107 = scmp.eq.s32.totalorder %s22, 1
      %p108 = por %p106, %p107
      %p109 = scmp.ne.s32.totalorder %s98, %s99
      %p110 = scmp.eq.s32.totalorder %s22, 0
      %p111 = por %p109, %p110
      %p112 = scmp.ne.s32.totalorder %s98, %s99
      %p113 = scmp.eq.s32.totalorder %s23, 1
      %p114 = por %p112, %p113
      %p116 = scmp.ne.s32.totalorder %s99, %s115
      %p117 = scmp.eq.s32.totalorder %s23, 0
      %p118 = por %p116, %p117
      %p119 = scmp.le.s32.totalorder 1, %s17
      %p120 = scmp.lt.s32.totalorder %s17, 3
      %p121 = pnand %p119, %p120
      %p122 = pneg %p121
      // Predicated region
      $region9: #{tpu_custom_call.1} parent=5 // pred_check
        _
      $region10: #{tpu_custom_call.1} parent=5 // pred_check_branch
        %124 = sbr.rel (%p121) target = $region12
      $region11: #{tpu_custom_call.1} parent=5 // pred_region
        %s125 = ssub.s32 %s17, 1
      $region12: #{tpu_custom_call.1} parent=5 // pred_fallthru
        _
      %p126 = scmp.lt.s32.totalorder %s17, 2
      // Predicated region
      $region13: #{tpu_custom_call.1} parent=5 // pred_check
        %p127 = pneg %p126
      $region14: #{tpu_custom_call.1} parent=5 // pred_check_branch
        %129 = sbr.rel (%p127) target = $region16
      $region15: #{tpu_custom_call.1} parent=5 // pred_region
        // Predicated region
        $region17: #{tpu_custom_call.1} parent=15 // pred_check
          %p130 = pneg %p51
        $region18: #{tpu_custom_call.1} parent=15 // pred_check_branch
          %132 = sbr.rel (%p130) target = $region20
        $region19: #{tpu_custom_call.1} parent=15 // pred_region
          %s133 = sand.u32 %s41, 1
          %s134 = scalar_lea.sflag [#allocation3], %s133
          %s135 = sand.u32 %s41, 1
          %s136 = smul.addr %s135, 8
          %s137 = scalar_lea.vmem [#allocation2], %s136
          %s138 = sadd.s32 %s24, %s25
          %s140 = ssub.s32 128, 128
          %141 = vsyncadd %s134, %s140
          %s142 = smul.addr %s138, 128
          %s143 = scalar_lea.hbm %s0, %s142
          %s145 = sshll.u32 %s137, 4
          %s146 = int_to_ptr.vmem [resolvable:$true] %s145
          %148 = dma.hbm_to_vmem [thread:$0]  %s143, 128, %s146, %s134
        $region20: #{tpu_custom_call.1} parent=15 // pred_fallthru
          _
        // Predicated region
        $region21: #{tpu_custom_call.1} parent=15 // pred_check
          %p149 = pneg %p79
        $region22: #{tpu_custom_call.1} parent=15 // pred_check_branch
          %151 = sbr.rel (%p149) target = $region24
        $region23: #{tpu_custom_call.1} parent=15 // pred_region
          %s152 = sand.u32 %s69, 1
          %s153 = scalar_lea.sflag [#allocation6], %s152
          %s154 = sand.u32 %s69, 1
          %s155 = smul.addr %s154, 8
          %s156 = scalar_lea.vmem [#allocation5], %s155
          %s157 = sadd.s32 %s24, %s25
          %s159 = ssub.s32 128, 128
          %160 = vsyncadd %s153, %s159
          %s161 = smul.addr %s157, 128
          %s162 = scalar_lea.hbm %s1, %s161
          %s164 = sshll.u32 %s156, 4
          %s165 = int_to_ptr.vmem [resolvable:$true] %s164
          %167 = dma.hbm_to_vmem [thread:$0]  %s162, 128, %s165, %s153
        $region24: #{tpu_custom_call.1} parent=15 // pred_fallthru
          _
      $region16: #{tpu_custom_call.1} parent=5 // pred_fallthru
        _
      %p168 = scmp.le.s32.totalorder 1, %s17
      %p169 = scmp.lt.s32.totalorder %s17, 3
      %p170 = pnand %p168, %p169
      %p171 = pneg %p170
      // Predicated region
      $region25: #{tpu_custom_call.1} parent=5 // pred_check
        _
      $region26: #{tpu_custom_call.1} parent=5 // pred_check_branch
        %173 = sbr.rel (%p170) target = $region28
      $region27: #{tpu_custom_call.1} parent=5 // pred_region
        %s174 = ssub.s32 %s17, 1
        %s175 = sand.u32 %s44, 1
        %s176 = scalar_lea.sflag [#allocation3], %s175
        %s177 = sand.u32 %s44, 1
        %s178 = smul.addr %s177, 8
        %s179 = scalar_lea.vmem [#allocation2], %s178
        // Predicated region
        $region29: #{tpu_custom_call.1} parent=27 // pred_check
          %p180 = pneg %p57
        $region30: #{tpu_custom_call.1} parent=27 // pred_check_branch
          %182 = sbr.rel (%p180) target = $region32
        $region31: #{tpu_custom_call.1} parent=27 // pred_region
          %183 = dma.done %s176, 128
        $region32: #{tpu_custom_call.1} parent=27 // pred_fallthru
          _
        %s184 = sand.u32 %s72, 1
        %s185 = scalar_lea.sflag [#allocation6], %s184
        %s186 = sand.u32 %s72, 1
        %s187 = smul.addr %s186, 8
        %s188 = scalar_lea.vmem [#allocation5], %s187
        // Predicated region
        $region33: #{tpu_custom_call.1} parent=27 // pred_check
          %p189 = pneg %p85
        $region34: #{tpu_custom_call.1} parent=27 // pred_check_branch
          %191 = sbr.rel (%p189) target = $region36
        $region35: #{tpu_custom_call.1} parent=27 // pred_region
          %192 = dma.done %s185, 128
        $region36: #{tpu_custom_call.1} parent=27 // pred_fallthru
          _
        %s193 = sand.u32 %s44, 1
        %s194 = scalar_lea.sflag [#allocation3], %s193
        %s195 = sand.u32 %s44, 1
        %s196 = smul.addr %s195, 8
        %s197 = scalar_lea.vmem [#allocation2], %s196
        %p198 = pneg %p57
        %p199 = pneg %p54
        %s200 = sand.u32 %s72, 1
        %s201 = scalar_lea.sflag [#allocation6], %s200
        %s202 = sand.u32 %s72, 1
        %s203 = smul.addr %s202, 8
        %s204 = scalar_lea.vmem [#allocation5], %s203
        %p205 = pneg %p85
        %p206 = pneg %p82
        %p207 = pneg %p111
        %p208 = pneg %p108
        %s209 = sand.u32 %s98, 1
        %s210 = scalar_lea.sflag [#allocation4], %s209
        %s211 = sand.u32 %s98, 1
        %s212 = smul.addr %s211, 32
        %s213 = scalar_lea.vmem [#allocation7], %s212
        %s214 = sadd.s32 %s26, %s27
        %s215 = sadd.s32 %s26, %s27
        %p216 = scmp.eq.s32.totalorder %s27, 0
        // Predicated region
        $region37: #{tpu_custom_call.1} parent=27 // pred_check
          %p217 = pneg %p216
        $region38: #{tpu_custom_call.1} parent=27 // pred_check_branch
          %219 = sbr.rel (%p217) target = $region40
        $region39: #{tpu_custom_call.1} parent=27 // pred_region
          %220 = vst [vmem:[%s213] sm:$0xff] 0.0
          %221 = vst [vmem:[%s213 + $0x8] sm:$0xff] 0.0
          %222 = vst [vmem:[%s213 + $0x10] sm:$0xff] 0.0
          %223 = vst [vmem:[%s213 + $0x18] sm:$0xff] 0.0
        $region40: #{tpu_custom_call.1} parent=27 // pred_fallthru
          _
        %v224 = vld [vmem:[%s179] sm:$0xff]
        %v225 = vld [vmem:[%s188] sm:$0xff]
        %v226 = vld [vmem:[%s213] sm:$0xff]
        %v227 = vadd.f32 %v224, 0.0
        %v228 = vadd.f32 %v226, %v227
        %229 = vst [vmem:[%s213] sm:$0xff] %v228
        %s230 = scalar_lea.vmem %s213, 8 [#allocation7]
        %v231 = vld [vmem:[%s230] sm:$0xff]
        %v232 = vmul.f32 %v224, %v224
        %v233 = vadd.f32 %v232, 0.0
        %v234 = vadd.f32 %v231, %v233
        %235 = vst [vmem:[%s230] sm:$0xff] %v234
        %s236 = scalar_lea.vmem %s213, 16 [#allocation7]
        %v237 = vld [vmem:[%s236] sm:$0xff]
        %v238 = vadd.f32 %v225, 0.0
        %v239 = vadd.f32 %v237, %v238
        %240 = vst [vmem:[%s236] sm:$0xff] %v239
        %s241 = scalar_lea.vmem %s213, 24 [#allocation7]
        %v242 = vld [vmem:[%s241] sm:$0xff]
        %v243 = vmul.f32 %v225, %v225
        %v244 = vadd.f32 %v243, 0.0
        %v245 = vadd.f32 %v242, %v244
        %246 = vst [vmem:[%s241] sm:$0xff] %v245
        %s247 = sand.u32 %s98, 1
        %s248 = scalar_lea.sflag [#allocation4], %s247
        %s249 = sand.u32 %s98, 1
        %s250 = smul.addr %s249, 32
        %s251 = scalar_lea.vmem [#allocation7], %s250
        // Predicated region
        $region41: #{tpu_custom_call.1} parent=27 // pred_check
          %p252 = pneg %p108
        $region42: #{tpu_custom_call.1} parent=27 // pred_check_branch
          %254 = sbr.rel (%p252) target = $region44
        $region43: #{tpu_custom_call.1} parent=27 // pred_region
          %s256 = ssub.s32 512, 512
          %257 = vsyncadd %s248, %s256
          %s258 = smul.addr %s26, 4
          %s259 = smul.addr %s258, 128
          %s260 = scalar_lea.hbm %s2, %s259
          %s261 = sshll.u32 %s251, 4
          %s262 = int_to_ptr.vmem [resolvable:$true] %s261
          %267 = dma.vmem_to_hbm [thread:$0]  %s262, 512, %s260, %s248, 128, 128, 8
        $region44: #{tpu_custom_call.1} parent=27 // pred_fallthru
          _
      $region28: #{tpu_custom_call.1} parent=5 // pred_fallthru
        _
      %p268 = scmp.le.s32.totalorder 2, %s17
      // Predicated region
      $region45: #{tpu_custom_call.1} parent=5 // pred_check
        %p269 = pneg %p268
      $region46: #{tpu_custom_call.1} parent=5 // pred_check_branch
        %271 = sbr.rel (%p269) target = $region48
      $region47: #{tpu_custom_call.1} parent=5 // pred_region
        %s272 = ssub.s32 %s17, 2
        // Predicated region
        $region49: #{tpu_custom_call.1} parent=47 // pred_check
          %p273 = pneg %p114
        $region50: #{tpu_custom_call.1} parent=47 // pred_check_branch
          %275 = sbr.rel (%p273) target = $region52
        $region51: #{tpu_custom_call.1} parent=47 // pred_region
          %s276 = sand.u32 %s99, 1
          %s277 = scalar_lea.sflag [#allocation4], %s276
          %s278 = sand.u32 %s99, 1
          %s279 = smul.addr %s278, 32
          %s280 = scalar_lea.vmem [#allocation7], %s279
          %281 = dma.done %s277, 512
        $region52: #{tpu_custom_call.1} parent=47 // pred_fallthru
          _
      $region48: #{tpu_custom_call.1} parent=5 // pred_fallthru
        _
    $region6: #{tpu_custom_call.1} parent=1 // loop_footer
      %s21 = sadd.s32 1, %s17
    $region7: #{tpu_custom_call.1} parent=1 // loop_footer_branch
      %16 = sbr.rel target = $region3
    $region8: #{tpu_custom_call.1} parent=1 // loop_exit
      _
    %282 = vsyncpa [#allocation3], 1
    %s283 = scalar_lea.sflag [#allocation3], 1
    %284 = vsyncpa %s283, 1
    %285 = vsyncpa [#allocation6], 1
    %s286 = scalar_lea.sflag [#allocation6], 1
    %287 = vsyncpa %s286, 1
    %288 = vsyncpa [#allocation4], 1
    %s289 = scalar_lea.sflag [#allocation4], 1
    %290 = vsyncpa %s289, 1

</llo_original>
